<compile_context>
chip_gen: v7x
topology: tpu7x:2x2x1
jax: 0.10.0
libtpu: 0.0.40
codegen_flags: <defaults>
</compile_context>

<pallas_src>
import jax
import jax.numpy as jnp
from jax.experimental import pallas as pl
from jax.experimental.pallas import tpu as pltpu


LANE = 128                 # lane-dense last dim -> full vregs, unmasked stores
DEFAULT_TILE_ROWS = 8192   # (8192, 128) f32 block = 4 MiB; ~16 MiB live double-buffered


def _round_up(x, m):
    return ((x + m - 1) // m) * m


def _multi_tensorcore():
    # v7x has 2 TensorCores per chip; v5e/v6e have 1.  Heuristic on device_kind.
    try:
        kind = jax.devices()[0].device_kind.lower()
        return ("v7" in kind) or ("7x" in kind)
    except Exception:
        return False


def _affine_kernel(w_ref, b_ref, x_ref, o_ref):
    # w_ref / b_ref: (1,) f32 scalars in SMEM; x_ref / o_ref: (tr, 128) VMEM tiles.
    x = x_ref[...].astype(jnp.float32)
    o_ref[...] = (x * w_ref[0] + b_ref[0]).astype(o_ref.dtype)


def linear_input_net1(x, weight, bias, *, tile_rows=DEFAULT_TILE_ROWS):
    """y = x @ W^T + b for W:(1,1), b:(1,), x:(N,1) -> (N,1)."""
    n, f = x.shape
    assert f == 1 and weight.shape == (1, 1) and bias.shape == (1,)
    dtype = x.dtype
    itemsize = jnp.dtype(dtype).itemsize
    w = weight.reshape((1,)).astype(jnp.float32)   # keep 32-bit scalars in SMEM
    b = bias.reshape((1,)).astype(jnp.float32)

    # Lane-dense view: (N, 1) -> (rows, 128).  Zero-copy when N % 128 == 0,
    # otherwise pad only the <128-element tail.
    rows = pl.cdiv(n, LANE)
    padded_n = rows * LANE
    tail_pad = padded_n - n
    if tail_pad == 0:
        slab = x.reshape((rows, LANE))                                   # free bitcast
    else:
        slab = jnp.pad(x.reshape((-1,)), (0, tail_pad)).reshape((rows, LANE))

    # Tile rows: sublane-aligned, rounded DOWN so no block exceeds the slab
    # (the ragged trailing grid block is masked by Pallas).  Tiny inputs use a
    # single full-array block.
    if rows < 8:
        tr = rows
    else:
        tr = max(8, (min(tile_rows, rows) // 8) * 8)
        if _multi_tensorcore() and rows > 8:
            # Ensure >= 2 grid steps so both v7x TensorCores get work.
            tr = min(tr, _round_up(pl.cdiv(rows, 2), 8))
    grid = (pl.cdiv(rows, tr),)

    out_slab = pl.pallas_call(
        _affine_kernel,
        out_shape=jax.ShapeDtypeStruct((rows, LANE), dtype),
        grid=grid,
        in_specs=[
            pl.BlockSpec(memory_space=pltpu.SMEM),         # weight scalar (f32)
            pl.BlockSpec(memory_space=pltpu.SMEM),         # bias scalar   (f32)
            pl.BlockSpec((tr, LANE), lambda i: (i, 0)),    # x tile (VMEM)
        ],
        out_specs=pl.BlockSpec((tr, LANE), lambda i: (i, 0)),
        compiler_params=pltpu.CompilerParams(
            dimension_semantics=("parallel",),   # shards tiles across v7x TCs
            vmem_limit_bytes=32 << 20,           # safe on v5e/v6e/v7x; fits 4x4 MiB live
        ),
        cost_estimate=pl.CostEstimate(
            flops=2 * padded_n,                  # one mul + one add per element
            transcendentals=0,
            bytes_accessed=2 * padded_n * itemsize,
        ),
    )(w, b, slab)

    # Restore the PyTorch (N, 1) layout (zero-copy in the divisible case).
    if tail_pad == 0:
        return out_slab.reshape((n, 1))
    return out_slab.reshape((-1,))[:n].reshape((n, 1))


if __name__ == "__main__":
    key = jax.random.PRNGKey(0)
    k_x, k_w, k_b = jax.random.split(key, 3)

    # Deterministic parameters consistent with nn.Linear(1, 1).
    weight = jax.random.uniform(k_w, (1, 1), jnp.float32, minval=-1.0, maxval=1.0)
    bias = jax.random.uniform(k_b, (1,), jnp.float32, minval=-1.0, maxval=1.0)

    # 1) Tiny input (rows < 8): single full-array block.
    N = 8
    x = jax.random.normal(k_x, (N, 1), dtype=jnp.float32)
    out = jax.block_until_ready(linear_input_net1(x, weight, bias))
    ref = x @ weight.T + bias
    assert out.shape == (N, 1)
    assert jnp.allclose(out, ref, atol=1e-6), "mismatch vs reference (small N)"

    # 2) N % 128 == 0: zero-copy reshape path + ragged trailing grid block.
    N2 = 1280                       # rows = 10, tile_rows=8 -> grid=(2,), ragged last block
    x2 = jax.random.normal(k_x, (N2, 1), dtype=jnp.float32)
    out2 = jax.block_until_ready(linear_input_net1(x2, weight, bias, tile_rows=8))
    ref2 = x2 @ weight.T + bias
    assert out2.shape == (N2, 1)
    assert jnp.allclose(out2, ref2, atol=1e-6), "mismatch vs reference (zero-copy ragged)"

    # 3) N % 128 != 0: tail-pad path + multi-step parallel grid.
    N3 = 3000
    x3 = jax.random.normal(k_x, (N3, 1), dtype=jnp.float32)
    out3 = jax.block_until_ready(linear_input_net1(x3, weight, bias, tile_rows=8))
    ref3 = x3 @ weight.T + bias
    assert out3.shape == (N3, 1)
    assert jnp.allclose(out3, ref3, atol=1e-6), "mismatch vs reference (tail-pad path)"

    print("KERNEL_OK")
</pallas_src>

<mosaic_0001>
module attributes {stable_mosaic.version = 11 : i64} {
  func.func @_affine_kernel(%arg0: i32, %arg1: memref<1xf32, #tpu.memory_space<smem>>, %arg2: memref<1xf32, #tpu.memory_space<smem>>, %arg3: memref<1x128xf32, #tpu.memory_space<vmem>>, %arg4: memref<1x128xf32, #tpu.memory_space<vmem>>) attributes {dimension_semantics = [#tpu.dimension_semantics<parallel>], iteration_bounds = array<i64: 1>, scalar_prefetch = 0 : i64, scratch_operands = 0 : i64, tpu.core_type = #tpu.core_type<tc>, window_params = [{transform_indices = @transform_0, window_bounds = array<i64: 1>}, {transform_indices = @transform_1, window_bounds = array<i64: 1>}, {transform_indices = @transform_2, window_bounds = array<i64: 1, 128>}, {transform_indices = @transform_3, window_bounds = array<i64: 1, 128>}]} {
    %c0 = arith.constant 0 : index
    %c0_0 = arith.constant 0 : index
    %0 = vector.load %arg3[%c0, %c0_0] : memref<1x128xf32, #tpu.memory_space<vmem>>, vector<1x128xf32>
    %c0_1 = arith.constant 0 : index
    %1 = memref.load %arg1[%c0_1] : memref<1xf32, #tpu.memory_space<smem>>
    %2 = vector.broadcast %1 : f32 to vector<1x128xf32>
    %3 = arith.mulf %0, %2 : vector<1x128xf32>
    %c0_2 = arith.constant 0 : index
    %4 = memref.load %arg2[%c0_2] : memref<1xf32, #tpu.memory_space<smem>>
    %5 = vector.broadcast %4 : f32 to vector<1x128xf32>
    %6 = arith.addf %3, %5 : vector<1x128xf32>
    %c0_3 = arith.constant 0 : index
    %c0_4 = arith.constant 0 : index
    %7 = vector.load %arg4[%c0_3, %c0_4] : memref<1x128xf32, #tpu.memory_space<vmem>>, vector<1x128xf32>
    tpu.vector_store %arg4[%c0_3, %c0_4], %6 {strides = array<i32>} : memref<1x128xf32, #tpu.memory_space<vmem>>, vector<1x128xf32>,
    return
  }
  func.func @transform_0(%arg0: i32) -> i32 {
    %c0_i32 = arith.constant 0 : i32
    %c0_i32_0 = arith.constant 0 : i32
    return %c0_i32 : i32
  }
  func.func @transform_1(%arg0: i32) -> i32 {
    %c0_i32 = arith.constant 0 : i32
    %c0_i32_0 = arith.constant 0 : i32
    return %c0_i32 : i32
  }
  func.func @transform_2(%arg0: i32) -> (i32, i32) {
    %c0_i32 = arith.constant 0 : i32
    %c0_i32_0 = arith.constant 0 : i32
    return %arg0, %c0_i32 : i32, i32
  }
  func.func @transform_3(%arg0: i32) -> (i32, i32) {
    %c0_i32 = arith.constant 0 : i32
    %c0_i32_0 = arith.constant 0 : i32
    return %arg0, %c0_i32 : i32, i32
  }
}

</mosaic_0001>

<llo_original>
// kernel: tpu_custom_call.1
$region0: #{tpu_custom_call.1}
  #allocation0 [shape = 'u32[]', space=smem, size = 0x4, offset = 0x4, fixed_abs, tag = 'smem constant byte address 0x4 - core index']
  #allocation1 [shape = 'u32[144,128]{1,0:T(1,128)}', space=vmem, size = 0x12000, scoped, tag = 'internal scratch']
  #allocation2 [shape = 'f32[1]{0:T(128)S(6)}', space=smem, size = 0x200, scoped, tag = 'scoped memory for tpu_custom_call.1']
  #allocation3 [shape = 'f32[1]{0:T(128)S(6)}', space=smem, size = 0x200, scoped, tag = 'scoped memory for tpu_custom_call.1']
  %s0 = inlined_call_operand.<no memory space> [shape: f32[1], index: 0, kind: input, shape index: {}]
  %s1 = inlined_call_operand.<no memory space> [shape: f32[1], index: 1, kind: input, shape index: {}]
  %s2 = inlined_call_operand.vmem [shape: f32[1,128], index: 2, kind: input, shape index: {}]
  %s3 = inlined_call_operand.hbm [shape: f32[1,128], index: 3, kind: output, shape index: {}]
  %s4 = sld [smem:[#allocation0]]
  $region22: #{tpu_custom_call.1} parent=0
    _
  %s6 = ssub.s32 1, %s4
  %s7 = scalar_select 0, %s6, %s4
  %8 = sst [smem:[#allocation2]] %s0
  %9 = sst [smem:[#allocation3]] %s1
  $region1: #{tpu_custom_call.1} parent=0
    #allocation4 [shape = 'u8[512]{0}', space=vmem, size = 0x400, scoped, tag = 'output window, operand 0, single buffered']
    #allocation5 [shape = 's32[1]{0}', space=sflag, size = 0x4, scoped, tag = 'scoped memory for tpu_custom_call.1']
    %10 = vsyncpa [#allocation5], 0
    // Predicated region
    $region2: #{tpu_custom_call.1} parent=1 // pred_check
      _
    $region3: #{tpu_custom_call.1} parent=1 // pred_check_branch
      %12 = sbr.rel (0) target = $region5
    $region4: #{tpu_custom_call.1} parent=1 // pred_region
      _
    $region5: #{tpu_custom_call.1} parent=1 // pred_fallthru
      _
    // Predicated region
    $region6: #{tpu_custom_call.1} parent=1 // pred_check
      _
    $region7: #{tpu_custom_call.1} parent=1 // pred_check_branch
      %14 = sbr.rel (0) target = $region9
    $region8: #{tpu_custom_call.1} parent=1 // pred_region
      _
    $region9: #{tpu_custom_call.1} parent=1 // pred_fallthru
      _
    // Predicated region
    $region10: #{tpu_custom_call.1} parent=1 // pred_check
      _
    $region11: #{tpu_custom_call.1} parent=1 // pred_check_branch
      %16 = sbr.rel (0) target = $region13
    $region12: #{tpu_custom_call.1} parent=1 // pred_region
      _
    $region13: #{tpu_custom_call.1} parent=1 // pred_fallthru
      _
    %v17 = vld [vmem:[%s2] sm:$0x1]
    %s18 = sld [smem:[#allocation2]]
    %v19 = vstv %s18
    %v20 = vmul.f32 %v17, %v19
    %s21 = sld [smem:[#allocation3]]
    %v22 = vstv %s21
    %v23 = vadd.f32 %v20, %v22
    %24 = vst [vmem:[#allocation4] sm:$0x1] %v23
    // Predicated region
    $region14: #{tpu_custom_call.1} parent=1 // pred_check
      _
    $region15: #{tpu_custom_call.1} parent=1 // pred_check_branch
      %26 = sbr.rel (0) target = $region17
    $region16: #{tpu_custom_call.1} parent=1 // pred_region
      %s28 = ssub.s32 16, 16
      %29 = vsyncadd [#allocation5], %s28
      %s31 = sshll.u32 [#allocation4], 4
      %s32 = int_to_ptr.vmem [resolvable:$true] %s31
      %34 = dma.vmem_to_hbm [thread:$0]  %s32, 16, %s3, [#allocation5]
    $region17: #{tpu_custom_call.1} parent=1 // pred_fallthru
      _
    // Predicated region
    $region18: #{tpu_custom_call.1} parent=1 // pred_check
      _
    $region19: #{tpu_custom_call.1} parent=1 // pred_check_branch
      %36 = sbr.rel (0) target = $region21
    $region20: #{tpu_custom_call.1} parent=1 // pred_region
      %37 = dma.done [#allocation5], 16
    $region21: #{tpu_custom_call.1} parent=1 // pred_fallthru
      _
    %38 = vsyncpa [#allocation5], 1

</llo_original>
